<compile_context>
chip_gen: v7x
topology: tpu7x:2x2x1
jax: 0.10.0
libtpu: 0.0.40
codegen_flags: <defaults>
</compile_context>

<pallas_src>
import math

import jax
import jax.numpy as jnp
from jax.experimental import pallas as pl
from jax.experimental.pallas import tpu as pltpu


def _round_up(x: int, m: int) -> int:
    return ((x + m - 1) // m) * m


def _rbm_chain_kernel(x_ref, w_ref, b_ref, u_ref, o_ref):
    """Run the full RBM sampling chain on one batch tile, VMEM-resident.

    x_ref: (TM, Dp) f32      padded 0/1 input activations
    w_ref: (S, Dp, Dp) bf16  per-step effective weights, already (in, out)
    b_ref: (S, 1, Dp) f32    per-step biases; padded lanes hold -1e9 -> sample 0
    u_ref: (S, TM, Dp) f32   per-step Uniform[0,1) draws
    o_ref: (TM, Dp) f32      final visible reconstruction (padded)
    """
    act = x_ref[...].astype(jnp.bfloat16)       # 0/1 values -> lossless bf16
    n_steps = w_ref.shape[0]                    # static (= 2 * num_layers)
    for s in range(n_steps):                    # small static unroll
        # bf16 operands on the MXU, f32 accumulation.
        z = jnp.dot(act, w_ref[s], preferred_element_type=jnp.float32)
        z = z + b_ref[s]                        # (1, Dp) broadcast over rows
        prob = jax.nn.sigmoid(z)                # elementwise kept in f32
        act = (prob > u_ref[s]).astype(jnp.bfloat16)
    o_ref[...] = act.astype(jnp.float32)


def rbm_chain(x_pad, w_stack, b_stack, u_stack, *, block_m):
    """Fused RBM chain: out = padded final sample, shape (Mp, Dp) f32."""
    Mp, Dp = x_pad.shape
    S = w_stack.shape[0]
    TM = block_m
    assert Mp % TM == 0
    grid = (Mp // TM,)
    return pl.pallas_call(
        _rbm_chain_kernel,
        out_shape=jax.ShapeDtypeStruct((Mp, Dp), jnp.float32),
        grid=grid,
        in_specs=[
            pl.BlockSpec((TM, Dp), lambda i: (i, 0)),        # activations (batch-tiled)
            pl.BlockSpec((S, Dp, Dp), lambda i: (0, 0, 0)),  # weight stack (resident)
            pl.BlockSpec((S, 1, Dp), lambda i: (0, 0, 0)),   # bias stack (resident)
            pl.BlockSpec((S, TM, Dp), lambda i: (0, i, 0)),  # uniforms (batch-tiled)
        ],
        out_specs=pl.BlockSpec((TM, Dp), lambda i: (i, 0)),
        compiler_params=pltpu.CompilerParams(
            dimension_semantics=("parallel",)),              # megacore split on v7x
    )(x_pad, w_stack, b_stack, u_stack)


class RBMPallas:
    """JAX/Pallas port of the PyTorch RBM module (forward pass only)."""

    def __init__(self, dims, key):
        self.dims = tuple(dims)
        L = len(dims) - 1
        self.num_layers = L
        self.Dp = _round_up(max(dims), 128)   # common lane-padded feature width

        # nn.Linear-style weights (out_features, in_features), uniform init.
        self.weights = []
        for i in range(L):
            key, sub = jax.random.split(key)
            bound = 1.0 / math.sqrt(dims[i])
            self.weights.append(
                jax.random.uniform(sub, (dims[i + 1], dims[i]),
                                   minval=-bound, maxval=bound,
                                   dtype=jnp.float32))
        self.input_bias = [jnp.zeros((dims[i],), jnp.float32) for i in range(L)]
        self.hidden_bias = [jnp.zeros((dims[i + 1],), jnp.float32) for i in range(L)]

        # Pre-build the fused, padded parameter stacks ONCE (no per-call .T).
        # Step order mirrors RBM.forward(): forward chain, then reversed
        # backward chain.
        steps = []
        for i in range(L):            # v -> h : x @ W_i^T + hidden_bias_i
            steps.append((self.weights[i].T, self.hidden_bias[i],
                          dims[i], dims[i + 1]))
        for i in reversed(range(L)):  # h -> v : x @ W_i + input_bias_i
            steps.append((self.weights[i], self.input_bias[i],
                          dims[i + 1], dims[i]))
        S = len(steps)

        w_stack = jnp.zeros((S, self.Dp, self.Dp), jnp.bfloat16)
        # Padded output lanes get a huge negative bias -> sigmoid == 0 -> 0.
        b_stack = jnp.full((S, 1, self.Dp), -1e9, jnp.float32)
        for s, (w_eff, bias, din, dout) in enumerate(steps):
            w_stack = w_stack.at[s, :din, :dout].set(w_eff.astype(jnp.bfloat16))
            b_stack = b_stack.at[s, 0, :dout].set(bias)
        self.w_stack = w_stack
        self.b_stack = b_stack
        self.num_steps = S

    def forward(self, v, key):
        v = jnp.asarray(v, jnp.float32)
        M = v.shape[0]
        Dp = self.Dp
        # Batch padding: sublane/MXU friendly; 128-row tiles for large batches.
        if M <= 128:
            Mp = _round_up(max(M, 8), 16)
            block_m = Mp
        else:
            Mp = _round_up(M, 128)
            block_m = 128
        x_pad = jnp.zeros((Mp, Dp), jnp.float32).at[:M, :self.dims[0]].set(v)
        # Uniform draws for every sampling step (torch.rand_like equivalent).
        # TODO(synk): move to in-kernel pltpu.prng_random_bits once the
        # interpret harness supports it (removes this small HBM input).
        u = jax.random.uniform(key, (self.num_steps, Mp, Dp), dtype=jnp.float32)
        out_pad = rbm_chain(x_pad, self.w_stack, self.b_stack, u,
                            block_m=block_m)
        return out_pad[:M, :self.dims[0]]


if __name__ == "__main__":
    key = jax.random.PRNGKey(0)
    key, k_param, k_data, k_sample = jax.random.split(key, 4)

    dims = [64, 32, 16]     # RBM stack: 64 visible -> 32 hidden -> 16 hidden
    batch = 2

    rbm = RBMPallas(dims, k_param)

    # Binary visible units, as an RBM would normally see.
    v = (jax.random.uniform(k_data, (batch, dims[0])) > 0.5).astype(jnp.float32)

    out = rbm.forward(v, k_sample)
    out = jax.block_until_ready(out)

    assert out.shape == (batch, dims[0]), out.shape
    assert out.dtype == jnp.float32
    # outputs are binary samples
    assert bool(jnp.all((out == 0.0) | (out == 1.0)))

    print("KERNEL_OK")
</pallas_src>

<mosaic_0001>
module attributes {stable_mosaic.version = 11 : i64} {
  func.func @_rbm_chain_kernel(%arg0: i32, %arg1: memref<16x128xf32, #tpu.memory_space<vmem>>, %arg2: memref<4x128x128xbf16, #tpu.memory_space<vmem>>, %arg3: memref<4x1x128xf32, #tpu.memory_space<vmem>>, %arg4: memref<4x16x128xf32, #tpu.memory_space<vmem>>, %arg5: memref<16x128xf32, #tpu.memory_space<vmem>>) attributes {dimension_semantics = [#tpu.dimension_semantics<parallel>], iteration_bounds = array<i64: 1>, scalar_prefetch = 0 : i64, scratch_operands = 0 : i64, tpu.core_type = #tpu.core_type<tc>, window_params = [{transform_indices = @transform_0, window_bounds = array<i64: 16, 128>}, {pipeline_mode = #tpu.pipeline_mode<synchronous>, transform_indices = @transform_1, window_bounds = array<i64: 4, 128, 128>}, {pipeline_mode = #tpu.pipeline_mode<synchronous>, transform_indices = @transform_2, window_bounds = array<i64: 4, 1, 128>}, {transform_indices = @transform_3, window_bounds = array<i64: 4, 16, 128>}, {transform_indices = @transform_4, window_bounds = array<i64: 16, 128>}]} {
    %c0 = arith.constant 0 : index
    %c0_0 = arith.constant 0 : index
    %0 = vector.load %arg1[%c0, %c0_0] : memref<16x128xf32, #tpu.memory_space<vmem>>, vector<16x128xf32>
    %1 = arith.truncf %0 : vector<16x128xf32> to vector<16x128xbf16>
    %c0_1 = arith.constant 0 : index
    %c0_2 = arith.constant 0 : index
    %c0_3 = arith.constant 0 : index
    %2 = vector.load %arg2[%c0_1, %c0_2, %c0_3] : memref<4x128x128xbf16, #tpu.memory_space<vmem>>, vector<1x128x128xbf16>
    %3 = vector.shape_cast %2 : vector<1x128x128xbf16> to vector<128x128xbf16>
    %cst = arith.constant dense<0.000000e+00> : vector<16x128xf32>
    %4 = tpu.matmul %1, %3, %cst {dimension_numbers = #tpu.dot_dimension_numbers<[1], [0], [0], [1], [0, 0, 1, 1], [], []>} : vector<16x128xbf16>, vector<128x128xbf16>, vector<16x128xf32> -> vector<16x128xf32>
    %c0_4 = arith.constant 0 : index
    %c0_5 = arith.constant 0 : index
    %c0_6 = arith.constant 0 : index
    %5 = vector.load %arg3[%c0_4, %c0_5, %c0_6] : memref<4x1x128xf32, #tpu.memory_space<vmem>>, vector<1x1x128xf32>
    %6 = vector.shape_cast %5 : vector<1x1x128xf32> to vector<1x128xf32>
    %7 = vector.broadcast %6 : vector<1x128xf32> to vector<16x128xf32>
    %8 = arith.addf %4, %7 : vector<16x128xf32>
    %9 = arith.negf %8 : vector<16x128xf32>
    %10 = math.exp %9 : vector<16x128xf32>
    %cst_7 = arith.constant 1.000000e+00 : f32
    %11 = vector.broadcast %cst_7 : f32 to vector<16x128xf32>
    %12 = arith.addf %11, %10 : vector<16x128xf32>
    %13 = arith.divf %11, %12 : vector<16x128xf32>
    %c0_8 = arith.constant 0 : index
    %c0_9 = arith.constant 0 : index
    %c0_10 = arith.constant 0 : index
    %14 = vector.load %arg4[%c0_8, %c0_9, %c0_10] : memref<4x16x128xf32, #tpu.memory_space<vmem>>, vector<1x16x128xf32>
    %15 = vector.shape_cast %14 : vector<1x16x128xf32> to vector<16x128xf32>
    %16 = arith.cmpf ogt, %13, %15 : vector<16x128xf32>
    %17 = arith.extui %16 : vector<16x128xi1> to vector<16x128xi32>
    %18 = arith.sitofp %17 : vector<16x128xi32> to vector<16x128xf32>
    %19 = arith.truncf %18 : vector<16x128xf32> to vector<16x128xbf16>
    %c1 = arith.constant 1 : index
    %c0_11 = arith.constant 0 : index
    %c0_12 = arith.constant 0 : index
    %20 = vector.load %arg2[%c1, %c0_11, %c0_12] : memref<4x128x128xbf16, #tpu.memory_space<vmem>>, vector<1x128x128xbf16>
    %21 = vector.shape_cast %20 : vector<1x128x128xbf16> to vector<128x128xbf16>
    %cst_13 = arith.constant dense<0.000000e+00> : vector<16x128xf32>
    %22 = tpu.matmul %19, %21, %cst_13 {dimension_numbers = #tpu.dot_dimension_numbers<[1], [0], [0], [1], [0, 0, 1, 1], [], []>} : vector<16x128xbf16>, vector<128x128xbf16>, vector<16x128xf32> -> vector<16x128xf32>
    %c1_14 = arith.constant 1 : index
    %c0_15 = arith.constant 0 : index
    %c0_16 = arith.constant 0 : index
    %23 = vector.load %arg3[%c1_14, %c0_15, %c0_16] : memref<4x1x128xf32, #tpu.memory_space<vmem>>, vector<1x1x128xf32>
    %24 = vector.shape_cast %23 : vector<1x1x128xf32> to vector<1x128xf32>
    %25 = vector.broadcast %24 : vector<1x128xf32> to vector<16x128xf32>
    %26 = arith.addf %22, %25 : vector<16x128xf32>
    %27 = arith.negf %26 : vector<16x128xf32>
    %28 = math.exp %27 : vector<16x128xf32>
    %cst_17 = arith.constant 1.000000e+00 : f32
    %29 = vector.broadcast %cst_17 : f32 to vector<16x128xf32>
    %30 = arith.addf %29, %28 : vector<16x128xf32>
    %31 = arith.divf %29, %30 : vector<16x128xf32>
    %c1_18 = arith.constant 1 : index
    %c0_19 = arith.constant 0 : index
    %c0_20 = arith.constant 0 : index
    %32 = vector.load %arg4[%c1_18, %c0_19, %c0_20] : memref<4x16x128xf32, #tpu.memory_space<vmem>>, vector<1x16x128xf32>
    %33 = vector.shape_cast %32 : vector<1x16x128xf32> to vector<16x128xf32>
    %34 = arith.cmpf ogt, %31, %33 : vector<16x128xf32>
    %35 = arith.extui %34 : vector<16x128xi1> to vector<16x128xi32>
    %36 = arith.sitofp %35 : vector<16x128xi32> to vector<16x128xf32>
    %37 = arith.truncf %36 : vector<16x128xf32> to vector<16x128xbf16>
    %c2 = arith.constant 2 : index
    %c0_21 = arith.constant 0 : index
    %c0_22 = arith.constant 0 : index
    %38 = vector.load %arg2[%c2, %c0_21, %c0_22] : memref<4x128x128xbf16, #tpu.memory_space<vmem>>, vector<1x128x128xbf16>
    %39 = vector.shape_cast %38 : vector<1x128x128xbf16> to vector<128x128xbf16>
    %cst_23 = arith.constant dense<0.000000e+00> : vector<16x128xf32>
    %40 = tpu.matmul %37, %39, %cst_23 {dimension_numbers = #tpu.dot_dimension_numbers<[1], [0], [0], [1], [0, 0, 1, 1], [], []>} : vector<16x128xbf16>, vector<128x128xbf16>, vector<16x128xf32> -> vector<16x128xf32>
    %c2_24 = arith.constant 2 : index
    %c0_25 = arith.constant 0 : index
    %c0_26 = arith.constant 0 : index
    %41 = vector.load %arg3[%c2_24, %c0_25, %c0_26] : memref<4x1x128xf32, #tpu.memory_space<vmem>>, vector<1x1x128xf32>
    %42 = vector.shape_cast %41 : vector<1x1x128xf32> to vector<1x128xf32>
    %43 = vector.broadcast %42 : vector<1x128xf32> to vector<16x128xf32>
    %44 = arith.addf %40, %43 : vector<16x128xf32>
    %45 = arith.negf %44 : vector<16x128xf32>
    %46 = math.exp %45 : vector<16x128xf32>
    %cst_27 = arith.constant 1.000000e+00 : f32
    %47 = vector.broadcast %cst_27 : f32 to vector<16x128xf32>
    %48 = arith.addf %47, %46 : vector<16x128xf32>
    %49 = arith.divf %47, %48 : vector<16x128xf32>
    %c2_28 = arith.constant 2 : index
    %c0_29 = arith.constant 0 : index
    %c0_30 = arith.constant 0 : index
    %50 = vector.load %arg4[%c2_28, %c0_29, %c0_30] : memref<4x16x128xf32, #tpu.memory_space<vmem>>, vector<1x16x128xf32>
    %51 = vector.shape_cast %50 : vector<1x16x128xf32> to vector<16x128xf32>
    %52 = arith.cmpf ogt, %49, %51 : vector<16x128xf32>
    %53 = arith.extui %52 : vector<16x128xi1> to vector<16x128xi32>
    %54 = arith.sitofp %53 : vector<16x128xi32> to vector<16x128xf32>
    %55 = arith.truncf %54 : vector<16x128xf32> to vector<16x128xbf16>
    %c3 = arith.constant 3 : index
    %c0_31 = arith.constant 0 : index
    %c0_32 = arith.constant 0 : index
    %56 = vector.load %arg2[%c3, %c0_31, %c0_32] : memref<4x128x128xbf16, #tpu.memory_space<vmem>>, vector<1x128x128xbf16>
    %57 = vector.shape_cast %56 : vector<1x128x128xbf16> to vector<128x128xbf16>
    %cst_33 = arith.constant dense<0.000000e+00> : vector<16x128xf32>
    %58 = tpu.matmul %55, %57, %cst_33 {dimension_numbers = #tpu.dot_dimension_numbers<[1], [0], [0], [1], [0, 0, 1, 1], [], []>} : vector<16x128xbf16>, vector<128x128xbf16>, vector<16x128xf32> -> vector<16x128xf32>
    %c3_34 = arith.constant 3 : index
    %c0_35 = arith.constant 0 : index
    %c0_36 = arith.constant 0 : index
    %59 = vector.load %arg3[%c3_34, %c0_35, %c0_36] : memref<4x1x128xf32, #tpu.memory_space<vmem>>, vector<1x1x128xf32>
    %60 = vector.shape_cast %59 : vector<1x1x128xf32> to vector<1x128xf32>
    %61 = vector.broadcast %60 : vector<1x128xf32> to vector<16x128xf32>
    %62 = arith.addf %58, %61 : vector<16x128xf32>
    %63 = arith.negf %62 : vector<16x128xf32>
    %64 = math.exp %63 : vector<16x128xf32>
    %cst_37 = arith.constant 1.000000e+00 : f32
    %65 = vector.broadcast %cst_37 : f32 to vector<16x128xf32>
    %66 = arith.addf %65, %64 : vector<16x128xf32>
    %67 = arith.divf %65, %66 : vector<16x128xf32>
    %c3_38 = arith.constant 3 : index
    %c0_39 = arith.constant 0 : index
    %c0_40 = arith.constant 0 : index
    %68 = vector.load %arg4[%c3_38, %c0_39, %c0_40] : memref<4x16x128xf32, #tpu.memory_space<vmem>>, vector<1x16x128xf32>
    %69 = vector.shape_cast %68 : vector<1x16x128xf32> to vector<16x128xf32>
    %70 = arith.cmpf ogt, %67, %69 : vector<16x128xf32>
    %71 = arith.extui %70 : vector<16x128xi1> to vector<16x128xi32>
    %72 = arith.sitofp %71 : vector<16x128xi32> to vector<16x128xf32>
    %73 = arith.truncf %72 : vector<16x128xf32> to vector<16x128xbf16>
    %74 = arith.extf %73 : vector<16x128xbf16> to vector<16x128xf32>
    %c0_41 = arith.constant 0 : index
    %c0_42 = arith.constant 0 : index
    %75 = vector.load %arg5[%c0_41, %c0_42] : memref<16x128xf32, #tpu.memory_space<vmem>>, vector<16x128xf32>
    tpu.vector_store %arg5[%c0_41, %c0_42], %74 {strides = array<i32>} : memref<16x128xf32, #tpu.memory_space<vmem>>, vector<16x128xf32>,
    return
  }
  func.func @transform_0(%arg0: i32) -> (i32, i32) {
    %c0_i32 = arith.constant 0 : i32
    %c0_i32_0 = arith.constant 0 : i32
    return %arg0, %c0_i32 : i32, i32
  }
  func.func @transform_1(%arg0: i32) -> (i32, i32, i32) {
    %c0_i32 = arith.constant 0 : i32
    %c0_i32_0 = arith.constant 0 : i32
    %c0_i32_1 = arith.constant 0 : i32
    %c0_i32_2 = arith.constant 0 : i32
    return %c0_i32, %c0_i32_0, %c0_i32_1 : i32, i32, i32
  }
  func.func @transform_2(%arg0: i32) -> (i32, i32, i32) {
    %c0_i32 = arith.constant 0 : i32
    %c0_i32_0 = arith.constant 0 : i32
    %c0_i32_1 = arith.constant 0 : i32
    %c0_i32_2 = arith.constant 0 : i32
    return %c0_i32, %c0_i32_0, %c0_i32_1 : i32, i32, i32
  }
  func.func @transform_3(%arg0: i32) -> (i32, i32, i32) {
    %c0_i32 = arith.constant 0 : i32
    %c0_i32_0 = arith.constant 0 : i32
    %c0_i32_1 = arith.constant 0 : i32
    return %c0_i32, %arg0, %c0_i32_0 : i32, i32, i32
  }
  func.func @transform_4(%arg0: i32) -> (i32, i32) {
    %c0_i32 = arith.constant 0 : i32
    %c0_i32_0 = arith.constant 0 : i32
    return %arg0, %c0_i32 : i32, i32
  }
}

</mosaic_0001>

<llo_original>
// kernel: tpu_custom_call.1
$region0: #{tpu_custom_call.1}
  #allocation0 [shape = 'u32[]', space=smem, size = 0x4, offset = 0x4, fixed_abs, tag = 'smem constant byte address 0x4 - core index']
  #allocation1 [shape = 'u32[144,128]{1,0:T(1,128)}', space=vmem, size = 0x12000, scoped, tag = 'internal scratch']
  %s0 = inlined_call_operand.hbm [shape: f32[16,128], index: 0, kind: input, shape index: {}]
  %s1 = inlined_call_operand.hbm [shape: bf16[4,128,128], index: 1, kind: input, shape index: {}]
  %s2 = inlined_call_operand.vmem [shape: f32[4,1,128], index: 2, kind: input, shape index: {}]
  %s3 = inlined_call_operand.hbm [shape: f32[4,16,128], index: 3, kind: input, shape index: {}]
  %s4 = inlined_call_operand.hbm [shape: f32[16,128], index: 4, kind: output, shape index: {}]
  %s5 = sld [smem:[#allocation0]]
  $region38: #{tpu_custom_call.1} parent=0
    _
  %s7 = ssub.s32 1, %s5
  %s8 = scalar_select 0, %s7, %s5
  $region1: #{tpu_custom_call.1} parent=0
    #allocation2 [shape = 'u8[8192]{0}', space=vmem, size = 0x2000, scoped, tag = 'input window, operand 0, single buffered']
    #allocation3 [shape = 's32[1]{0}', space=sflag, size = 0x4, scoped, tag = 'scoped memory for tpu_custom_call.1']
    #allocation4 [shape = 's32[1]{0}', space=sflag, size = 0x4, scoped, tag = 'scoped memory for tpu_custom_call.1']
    #allocation5 [shape = 'u8[131072]{0}', space=vmem, size = 0x20000, scoped, tag = 'input window, operand 1, single buffered']
    #allocation6 [shape = 's32[1]{0}', space=sflag, size = 0x4, scoped, tag = 'scoped memory for tpu_custom_call.1']
    #allocation7 [shape = 'u8[32768]{0}', space=vmem, size = 0x8000, scoped, tag = 'input window, operand 3, single buffered']
    #allocation8 [shape = 'u8[8192]{0}', space=vmem, size = 0x2000, scoped, tag = 'output window, operand 0, single buffered']
    %9 = vsyncpa [#allocation3], 0
    %10 = vsyncpa [#allocation6], 0
    %11 = vsyncpa [#allocation4], 0
    // Predicated region
    $region2: #{tpu_custom_call.1} parent=1 // pred_check
      _
    $region3: #{tpu_custom_call.1} parent=1 // pred_check_branch
      %13 = sbr.rel (0) target = $region5
    $region4: #{tpu_custom_call.1} parent=1 // pred_region
      %s15 = ssub.s32 256, 256
      %16 = vsyncadd [#allocation3], %s15
      %s17 = sshll.u32 [#allocation2], 4
      %s18 = int_to_ptr.vmem [resolvable:$true] %s17
      %23 = dma.hbm_to_vmem [thread:$0]  %s0, 256, %s18, [#allocation3], 128, 128, 8
    $region5: #{tpu_custom_call.1} parent=1 // pred_fallthru
      _
    // Predicated region
    $region6: #{tpu_custom_call.1} parent=1 // pred_check
      _
    $region7: #{tpu_custom_call.1} parent=1 // pred_check_branch
      %25 = sbr.rel (0) target = $region9
    $region8: #{tpu_custom_call.1} parent=1 // pred_region
      %s27 = ssub.s32 4096, 4096
      %28 = vsyncadd [#allocation6], %s27
      %s29 = sshll.u32 [#allocation5], 4
      %s30 = int_to_ptr.vmem [resolvable:$true] %s29
      %35 = dma.hbm_to_vmem [thread:$0]  %s1, 4096, %s30, [#allocation6], 64, 64, 4
    $region9: #{tpu_custom_call.1} parent=1 // pred_fallthru
      _
    // Predicated region
    $region10: #{tpu_custom_call.1} parent=1 // pred_check
      _
    $region11: #{tpu_custom_call.1} parent=1 // pred_check_branch
      %37 = sbr.rel (0) target = $region13
    $region12: #{tpu_custom_call.1} parent=1 // pred_region
      _
    $region13: #{tpu_custom_call.1} parent=1 // pred_fallthru
      _
    // Predicated region
    $region14: #{tpu_custom_call.1} parent=1 // pred_check
      _
    $region15: #{tpu_custom_call.1} parent=1 // pred_check_branch
      %39 = sbr.rel (0) target = $region17
    $region16: #{tpu_custom_call.1} parent=1 // pred_region
      %s41 = ssub.s32 1024, 1024
      %42 = vsyncadd [#allocation6], %s41
      %s43 = sshll.u32 [#allocation7], 4
      %s44 = int_to_ptr.vmem [resolvable:$true] %s43
      %49 = dma.hbm_to_vmem [thread:$0]  %s3, 1024, %s44, [#allocation6], 128, 128, 8
    $region17: #{tpu_custom_call.1} parent=1 // pred_fallthru
      _
    // Predicated region
    $region18: #{tpu_custom_call.1} parent=1 // pred_check
      _
    $region19: #{tpu_custom_call.1} parent=1 // pred_check_branch
      %51 = sbr.rel (0) target = $region21
    $region20: #{tpu_custom_call.1} parent=1 // pred_region
      %52 = dma.done [#allocation3], 256
    $region21: #{tpu_custom_call.1} parent=1 // pred_fallthru
      _
    // Predicated region
    $region22: #{tpu_custom_call.1} parent=1 // pred_check
      _
    $region23: #{tpu_custom_call.1} parent=1 // pred_check_branch
      %54 = sbr.rel (0) target = $region25
    $region24: #{tpu_custom_call.1} parent=1 // pred_region
      %55 = dma.done [#allocation6], 4096
    $region25: #{tpu_custom_call.1} parent=1 // pred_fallthru
      _
    // Predicated region
    $region26: #{tpu_custom_call.1} parent=1 // pred_check
      _
    $region27: #{tpu_custom_call.1} parent=1 // pred_check_branch
      %57 = sbr.rel (0) target = $region29
    $region28: #{tpu_custom_call.1} parent=1 // pred_region
      %58 = dma.done [#allocation6], 1024
    $region29: #{tpu_custom_call.1} parent=1 // pred_fallthru
      _
    %v60 = vld [vmem:[#allocation2] sm:$0xff]
    %v61 = vld [vmem:[#allocation2 + $0x8] sm:$0xff]
    %v62 = vpack.c.bf16 %v61, %v60
    %v63 = vld [vmem:[#allocation5] sm:$0xf]
    %v64 = vld [vmem:[#allocation5 + $0x4] sm:$0xf]
    %v65 = vld [vmem:[#allocation5 + $0x8] sm:$0xf]
    %v66 = vld [vmem:[#allocation5 + $0xc] sm:$0xf]
    %v67 = vld [vmem:[#allocation5 + $0x10] sm:$0xf]
    %v68 = vld [vmem:[#allocation5 + $0x14] sm:$0xf]
    %v69 = vld [vmem:[#allocation5 + $0x18] sm:$0xf]
    %v70 = vld [vmem:[#allocation5 + $0x1c] sm:$0xf]
    %v71 = vld [vmem:[#allocation5 + $0x20] sm:$0xf]
    %v72 = vld [vmem:[#allocation5 + $0x24] sm:$0xf]
    %v73 = vld [vmem:[#allocation5 + $0x28] sm:$0xf]
    %v74 = vld [vmem:[#allocation5 + $0x2c] sm:$0xf]
    %v75 = vld [vmem:[#allocation5 + $0x30] sm:$0xf]
    %v76 = vld [vmem:[#allocation5 + $0x34] sm:$0xf]
    %v77 = vld [vmem:[#allocation5 + $0x38] sm:$0xf]
    %v78 = vld [vmem:[#allocation5 + $0x3c] sm:$0xf]
    %v79 = vld [vmem:[%s2] sm:$0x1]
    %v81 = vlaneseq
    %v82 = vshrl.u32 %v81, 7
    %v83 = vsub.s32 0, %v82
    %v84 = vrot.slane %v79, %v83
    %v102 = vunpack.c.l.b16 %v63
    %v103 = vunpack.c.l.b16 %v64
    %v104 = vunpack.c.l.b16 %v65
    %v105 = vunpack.c.l.b16 %v66
    %v106 = vunpack.c.l.b16 %v67
    %v107 = vunpack.c.l.b16 %v68
    %v108 = vunpack.c.l.b16 %v69
    %v109 = vunpack.c.l.b16 %v70
    %v110 = vunpack.c.l.b16 %v71
    %v111 = vunpack.c.l.b16 %v72
    %v112 = vunpack.c.l.b16 %v73
    %v113 = vunpack.c.l.b16 %v74
    %v114 = vunpack.c.l.b16 %v75
    %v115 = vunpack.c.l.b16 %v76
    %v116 = vunpack.c.l.b16 %v77
    %v117 = vunpack.c.l.b16 %v78
    %v118 = vpack.c.b16 %v103, %v102
    %v119 = vpack.c.b16 %v105, %v104
    %v120 = vpack.c.b16 %v107, %v106
    %v121 = vpack.c.b16 %v109, %v108
    %v122 = vpack.c.b16 %v111, %v110
    %v123 = vpack.c.b16 %v113, %v112
    %v124 = vpack.c.b16 %v115, %v114
    %v125 = vpack.c.b16 %v117, %v116
    %134 = vmatprep.subr.bf16.mxu0 0
    %135 = vmatpush1.bf16.msra.mxu0 %v118
    %136 = vmatprep.subr.bf16.mxu0 0
    %137 = vmatpush1.bf16.msra.mxu0 %v119
    %138 = vmatprep.subr.bf16.mxu0 0
    %139 = vmatpush1.bf16.msra.mxu0 %v120
    %140 = vmatprep.subr.bf16.mxu0 0
    %141 = vmatpush1.bf16.msra.mxu0 %v121
    %142 = vmatprep.subr.bf16.mxu0 0
    %143 = vmatpush1.bf16.msra.mxu0 %v122
    %144 = vmatprep.subr.bf16.mxu0 0
    %145 = vmatpush1.bf16.msra.mxu0 %v123
    %146 = vmatprep.subr.bf16.mxu0 0
    %147 = vmatpush1.bf16.msra.mxu0 %v124
    %148 = vmatprep.subr.bf16.mxu0 0
    %149 = vmatpush1.bf16.msra.mxu0 %v125
    %150 = vmatprep.subr.bf16.mxu0 0
    %151 = vmatpush1.bf16.msra.mxu0 0
    %152 = vmatprep.subr.bf16.mxu0 0
    %153 = vmatpush1.bf16.msra.mxu0 0
    %154 = vmatprep.subr.bf16.mxu0 0
    %155 = vmatpush1.bf16.msra.mxu0 0
    %156 = vmatprep.subr.bf16.mxu0 0
    %157 = vmatpush1.bf16.msra.mxu0 0
    %158 = vmatprep.subr.bf16.mxu0 0
    %159 = vmatpush1.bf16.msra.mxu0 0
    %160 = vmatprep.subr.bf16.mxu0 0
    %161 = vmatpush1.bf16.msra.mxu0 0
    %162 = vmatprep.subr.bf16.mxu0 0
    %163 = vmatpush1.bf16.msra.mxu0 0
    %164 = vmatprep.subr.bf16.mxu0 0
    %165 = vmatpush1.bf16.msra.mxu0 0
    %166 = vmatprep.mubr.bf16.mxu0 0
    %167 = vmatmul.mubr.bf16.gmra.mrb[0].mxu0 %v62
    %v168 = vpop.f32.mrb[0].mxu0
    %v169 = vadd.f32 %v84, %v168
    %v170 = vpop.f32.mrb[0].mxu0
    %v171 = vpop.f32.mrb[0].mxu0
    %v172 = vadd.f32 %v84, %v171
    %v173 = vpop.f32.mrb[0].mxu0
    %174 = vdwg.mxu0
    %v175 = vxor.u32 %v169, 2147483648
    %v176 = vxor.u32 %v172, 2147483648
    %v177 = vmul.f32 %v175, 1.442695
    %v178 = vpow.pop %v177
    %v179 = vmul.f32 %v176, 1.442695
    %v180 = vpow.pop %v179
    %v181 = vadd.f32 %v178, 1.0
    %v182 = vadd.f32 %v180, 1.0
    %v183 = vrcp.pop %v181
    %v184 = vmul.f32 1.0, %v183
    %v185 = vrcp.pop %v182
    %v186 = vmul.f32 1.0, %v185
    %v187 = vld [vmem:[#allocation7] sm:$0xff]
    %v188 = vld [vmem:[#allocation7 + $0x8] sm:$0xff]
    %vm189 = vcmp.gt.f32.partialorder %v184, %v187
    %vm190 = vcmp.gt.f32.partialorder %v186, %v188
    %v191 = vsel %vm189, 1, 0
    %v192 = vsel %vm190, 1, 0
    %v193 = vcvt.s32.f32 %v191
    %v194 = vcvt.s32.f32 %v192
    %v195 = vpack.c.bf16 %v194, %v193
    %s196 = scalar_lea.vmem [#allocation5], 64
    %v197 = vld [vmem:[%s196] sm:$0xf]
    %v198 = vld [vmem:[%s196 + $0x4] sm:$0xf]
    %v199 = vld [vmem:[%s196 + $0x8] sm:$0xf]
    %v200 = vld [vmem:[%s196 + $0xc] sm:$0xf]
    %v201 = vld [vmem:[%s196 + $0x10] sm:$0xf]
    %v202 = vld [vmem:[%s196 + $0x14] sm:$0xf]
    %v203 = vld [vmem:[%s196 + $0x18] sm:$0xf]
    %v204 = vld [vmem:[%s196 + $0x1c] sm:$0xf]
    %v205 = vld [vmem:[%s196 + $0x20] sm:$0xf]
    %v206 = vld [vmem:[%s196 + $0x24] sm:$0xf]
    %v207 = vld [vmem:[%s196 + $0x28] sm:$0xf]
    %v208 = vld [vmem:[%s196 + $0x2c] sm:$0xf]
    %v209 = vld [vmem:[%s196 + $0x30] sm:$0xf]
    %v210 = vld [vmem:[%s196 + $0x34] sm:$0xf]
    %v211 = vld [vmem:[%s196 + $0x38] sm:$0xf]
    %v212 = vld [vmem:[%s196 + $0x3c] sm:$0xf]
    %s213 = scalar_lea.vmem %s2, 1
    %v214 = vld [vmem:[%s213] sm:$0x1]
    %v216 = vlaneseq
    %v217 = vshrl.u32 %v216, 7
    %v218 = vsub.s32 0, %v217
    %v219 = vrot.slane %v214, %v218
    %v237 = vunpack.c.l.b16 %v197
    %v238 = vunpack.c.l.b16 %v198
    %v239 = vunpack.c.l.b16 %v199
    %v240 = vunpack.c.l.b16 %v200
    %v241 = vunpack.c.l.b16 %v201
    %v242 = vunpack.c.l.b16 %v202
    %v243 = vunpack.c.l.b16 %v203
    %v244 = vunpack.c.l.b16 %v204
    %v245 = vunpack.c.l.b16 %v205
    %v246 = vunpack.c.l.b16 %v206
    %v247 = vunpack.c.l.b16 %v207
    %v248 = vunpack.c.l.b16 %v208
    %v249 = vunpack.c.l.b16 %v209
    %v250 = vunpack.c.l.b16 %v210
    %v251 = vunpack.c.l.b16 %v211
    %v252 = vunpack.c.l.b16 %v212
    %v253 = vpack.c.b16 %v238, %v237
    %v254 = vpack.c.b16 %v240, %v239
    %v255 = vpack.c.b16 %v242, %v241
    %v256 = vpack.c.b16 %v244, %v243
    %v257 = vpack.c.b16 %v246, %v245
    %v258 = vpack.c.b16 %v248, %v247
    %v259 = vpack.c.b16 %v250, %v249
    %v260 = vpack.c.b16 %v252, %v251
    %269 = vmatprep.subr.bf16.mxu0 0
    %270 = vmatpush1.bf16.msra.mxu0 %v253
    %271 = vmatprep.subr.bf16.mxu0 0
    %272 = vmatpush1.bf16.msra.mxu0 %v254
    %273 = vmatprep.subr.bf16.mxu0 0
    %274 = vmatpush1.bf16.msra.mxu0 %v255
    %275 = vmatprep.subr.bf16.mxu0 0
    %276 = vmatpush1.bf16.msra.mxu0 %v256
    %277 = vmatprep.subr.bf16.mxu0 0
    %278 = vmatpush1.bf16.msra.mxu0 %v257
    %279 = vmatprep.subr.bf16.mxu0 0
    %280 = vmatpush1.bf16.msra.mxu0 %v258
    %281 = vmatprep.subr.bf16.mxu0 0
    %282 = vmatpush1.bf16.msra.mxu0 %v259
    %283 = vmatprep.subr.bf16.mxu0 0
    %284 = vmatpush1.bf16.msra.mxu0 %v260
    %285 = vmatprep.subr.bf16.mxu0 0
    %286 = vmatpush1.bf16.msra.mxu0 0
    %287 = vmatprep.subr.bf16.mxu0 0
    %288 = vmatpush1.bf16.msra.mxu0 0
    %289 = vmatprep.subr.bf16.mxu0 0
    %290 = vmatpush1.bf16.msra.mxu0 0
    %291 = vmatprep.subr.bf16.mxu0 0
    %292 = vmatpush1.bf16.msra.mxu0 0
    %293 = vmatprep.subr.bf16.mxu0 0
    %294 = vmatpush1.bf16.msra.mxu0 0
    %295 = vmatprep.subr.bf16.mxu0 0
    %296 = vmatpush1.bf16.msra.mxu0 0
    %297 = vmatprep.subr.bf16.mxu0 0
    %298 = vmatpush1.bf16.msra.mxu0 0
    %299 = vmatprep.subr.bf16.mxu0 0
    %300 = vmatpush1.bf16.msra.mxu0 0
    %301 = vmatprep.mubr.bf16.mxu0 0
    %302 = vmatmul.mubr.bf16.gmra.mrb[0].mxu0 %v195
    %v303 = vpop.f32.mrb[0].mxu0
    %v304 = vadd.f32 %v219, %v303
    %v305 = vpop.f32.mrb[0].mxu0
    %v306 = vpop.f32.mrb[0].mxu0
    %v307 = vadd.f32 %v219, %v306
    %v308 = vpop.f32.mrb[0].mxu0
    %309 = vdwg.mxu0
    %v310 = vxor.u32 %v304, 2147483648
    %v311 = vxor.u32 %v307, 2147483648
    %v312 = vmul.f32 %v310, 1.442695
    %v313 = vpow.pop %v312
    %v314 = vmul.f32 %v311, 1.442695
    %v315 = vpow.pop %v314
    %v316 = vadd.f32 %v313, 1.0
    %v317 = vadd.f32 %v315, 1.0
    %v318 = vrcp.pop %v316
    %v319 = vmul.f32 1.0, %v318
    %v320 = vrcp.pop %v317
    %v321 = vmul.f32 1.0, %v320
    %s322 = scalar_lea.vmem [#allocation7], 16
    %v323 = vld [vmem:[%s322] sm:$0xff]
    %v324 = vld [vmem:[%s322 + $0x8] sm:$0xff]
    %vm325 = vcmp.gt.f32.partialorder %v319, %v323
    %vm326 = vcmp.gt.f32.partialorder %v321, %v324
    %v327 = vsel %vm325, 1, 0
    %v328 = vsel %vm326, 1, 0
    %v329 = vcvt.s32.f32 %v327
    %v330 = vcvt.s32.f32 %v328
    %v331 = vpack.c.bf16 %v330, %v329
    %s332 = scalar_lea.vmem [#allocation5], 128
    %v333 = vld [vmem:[%s332] sm:$0xf]
    %v334 = vld [vmem:[%s332 + $0x4] sm:$0xf]
    %v335 = vld [vmem:[%s332 + $0x8] sm:$0xf]
    %v336 = vld [vmem:[%s332 + $0xc] sm:$0xf]
    %v337 = vld [vmem:[%s332 + $0x10] sm:$0xf]
    %v338 = vld [vmem:[%s332 + $0x14] sm:$0xf]
    %v339 = vld [vmem:[%s332 + $0x18] sm:$0xf]
    %v340 = vld [vmem:[%s332 + $0x1c] sm:$0xf]
    %v341 = vld [vmem:[%s332 + $0x20] sm:$0xf]
    %v342 = vld [vmem:[%s332 + $0x24] sm:$0xf]
    %v343 = vld [vmem:[%s332 + $0x28] sm:$0xf]
    %v344 = vld [vmem:[%s332 + $0x2c] sm:$0xf]
    %v345 = vld [vmem:[%s332 + $0x30] sm:$0xf]
    %v346 = vld [vmem:[%s332 + $0x34] sm:$0xf]
    %v347 = vld [vmem:[%s332 + $0x38] sm:$0xf]
    %v348 = vld [vmem:[%s332 + $0x3c] sm:$0xf]
    %s349 = scalar_lea.vmem %s2, 2
    %v350 = vld [vmem:[%s349] sm:$0x1]
    %v352 = vlaneseq
    %v353 = vshrl.u32 %v352, 7
    %v354 = vsub.s32 0, %v353
    %v355 = vrot.slane %v350, %v354
    %v373 = vunpack.c.l.b16 %v333
    %v374 = vunpack.c.l.b16 %v334
    %v375 = vunpack.c.l.b16 %v335
    %v376 = vunpack.c.l.b16 %v336
    %v377 = vunpack.c.l.b16 %v337
    %v378 = vunpack.c.l.b16 %v338
    %v379 = vunpack.c.l.b16 %v339
    %v380 = vunpack.c.l.b16 %v340
    %v381 = vunpack.c.l.b16 %v341
    %v382 = vunpack.c.l.b16 %v342
    %v383 = vunpack.c.l.b16 %v343
    %v384 = vunpack.c.l.b16 %v344
    %v385 = vunpack.c.l.b16 %v345
    %v386 = vunpack.c.l.b16 %v346
    %v387 = vunpack.c.l.b16 %v347
    %v388 = vunpack.c.l.b16 %v348
    %v389 = vpack.c.b16 %v374, %v373
    %v390 = vpack.c.b16 %v376, %v375
    %v391 = vpack.c.b16 %v378, %v377
    %v392 = vpack.c.b16 %v380, %v379
    %v393 = vpack.c.b16 %v382, %v381
    %v394 = vpack.c.b16 %v384, %v383
    %v395 = vpack.c.b16 %v386, %v385
    %v396 = vpack.c.b16 %v388, %v387
    %405 = vmatprep.subr.bf16.mxu0 0
    %406 = vmatpush1.bf16.msra.mxu0 %v389
    %407 = vmatprep.subr.bf16.mxu0 0
    %408 = vmatpush1.bf16.msra.mxu0 %v390
    %409 = vmatprep.subr.bf16.mxu0 0
    %410 = vmatpush1.bf16.msra.mxu0 %v391
    %411 = vmatprep.subr.bf16.mxu0 0
    %412 = vmatpush1.bf16.msra.mxu0 %v392
    %413 = vmatprep.subr.bf16.mxu0 0
    %414 = vmatpush1.bf16.msra.mxu0 %v393
    %415 = vmatprep.subr.bf16.mxu0 0
    %416 = vmatpush1.bf16.msra.mxu0 %v394
    %417 = vmatprep.subr.bf16.mxu0 0
    %418 = vmatpush1.bf16.msra.mxu0 %v395
    %419 = vmatprep.subr.bf16.mxu0 0
    %420 = vmatpush1.bf16.msra.mxu0 %v396
    %421 = vmatprep.subr.bf16.mxu0 0
    %422 = vmatpush1.bf16.msra.mxu0 0
    %423 = vmatprep.subr.bf16.mxu0 0
    %424 = vmatpush1.bf16.msra.mxu0 0
    %425 = vmatprep.subr.bf16.mxu0 0
    %426 = vmatpush1.bf16.msra.mxu0 0
    %427 = vmatprep.subr.bf16.mxu0 0
    %428 = vmatpush1.bf16.msra.mxu0 0
    %429 = vmatprep.subr.bf16.mxu0 0
    %430 = vmatpush1.bf16.msra.mxu0 0
    %431 = vmatprep.subr.bf16.mxu0 0
    %432 = vmatpush1.bf16.msra.mxu0 0
    %433 = vmatprep.subr.bf16.mxu0 0
    %434 = vmatpush1.bf16.msra.mxu0 0
    %435 = vmatprep.subr.bf16.mxu0 0
    %436 = vmatpush1.bf16.msra.mxu0 0
    %437 = vmatprep.mubr.bf16.mxu0 0
    %438 = vmatmul.mubr.bf16.gmra.mrb[0].mxu0 %v331
    %v439 = vpop.f32.mrb[0].mxu0
    %v440 = vadd.f32 %v355, %v439
    %v441 = vpop.f32.mrb[0].mxu0
    %v442 = vpop.f32.mrb[0].mxu0
    %v443 = vadd.f32 %v355, %v442
    %v444 = vpop.f32.mrb[0].mxu0
    %445 = vdwg.mxu0
    %v446 = vxor.u32 %v440, 2147483648
    %v447 = vxor.u32 %v443, 2147483648
    %v448 = vmul.f32 %v446, 1.442695
    %v449 = vpow.pop %v448
    %v450 = vmul.f32 %v447, 1.442695
    %v451 = vpow.pop %v450
    %v452 = vadd.f32 %v449, 1.0
    %v453 = vadd.f32 %v451, 1.0
    %v454 = vrcp.pop %v452
    %v455 = vmul.f32 1.0, %v454
    %v456 = vrcp.pop %v453
    %v457 = vmul.f32 1.0, %v456
    %s458 = scalar_lea.vmem [#allocation7], 32
    %v459 = vld [vmem:[%s458] sm:$0xff]
    %v460 = vld [vmem:[%s458 + $0x8] sm:$0xff]
    %vm461 = vcmp.gt.f32.partialorder %v455, %v459
    %vm462 = vcmp.gt.f32.partialorder %v457, %v460
    %v463 = vsel %vm461, 1, 0
    %v464 = vsel %vm462, 1, 0
    %v465 = vcvt.s32.f32 %v463
    %v466 = vcvt.s32.f32 %v464
    %v467 = vpack.c.bf16 %v466, %v465
    %s468 = scalar_lea.vmem [#allocation5], 192
    %v469 = vld [vmem:[%s468] sm:$0xf]
    %v470 = vld [vmem:[%s468 + $0x4] sm:$0xf]
    %v471 = vld [vmem:[%s468 + $0x8] sm:$0xf]
    %v472 = vld [vmem:[%s468 + $0xc] sm:$0xf]
    %v473 = vld [vmem:[%s468 + $0x10] sm:$0xf]
    %v474 = vld [vmem:[%s468 + $0x14] sm:$0xf]
    %v475 = vld [vmem:[%s468 + $0x18] sm:$0xf]
    %v476 = vld [vmem:[%s468 + $0x1c] sm:$0xf]
    %v477 = vld [vmem:[%s468 + $0x20] sm:$0xf]
    %v478 = vld [vmem:[%s468 + $0x24] sm:$0xf]
    %v479 = vld [vmem:[%s468 + $0x28] sm:$0xf]
    %v480 = vld [vmem:[%s468 + $0x2c] sm:$0xf]
    %v481 = vld [vmem:[%s468 + $0x30] sm:$0xf]
    %v482 = vld [vmem:[%s468 + $0x34] sm:$0xf]
    %v483 = vld [vmem:[%s468 + $0x38] sm:$0xf]
    %v484 = vld [vmem:[%s468 + $0x3c] sm:$0xf]
    %s485 = scalar_lea.vmem %s2, 3
    %v486 = vld [vmem:[%s485] sm:$0x1]
    %v488 = vlaneseq
    %v489 = vshrl.u32 %v488, 7
    %v490 = vsub.s32 0, %v489
    %v491 = vrot.slane %v486, %v490
    %v509 = vunpack.c.l.b16 %v469
    %v510 = vunpack.c.l.b16 %v470
    %v511 = vunpack.c.l.b16 %v471
    %v512 = vunpack.c.l.b16 %v472
    %v513 = vunpack.c.l.b16 %v473
    %v514 = vunpack.c.l.b16 %v474
    %v515 = vunpack.c.l.b16 %v475
    %v516 = vunpack.c.l.b16 %v476
    %v517 = vunpack.c.l.b16 %v477
    %v518 = vunpack.c.l.b16 %v478
    %v519 = vunpack.c.l.b16 %v479
    %v520 = vunpack.c.l.b16 %v480
    %v521 = vunpack.c.l.b16 %v481
    %v522 = vunpack.c.l.b16 %v482
    %v523 = vunpack.c.l.b16 %v483
    %v524 = vunpack.c.l.b16 %v484
    %v525 = vpack.c.b16 %v510, %v509
    %v526 = vpack.c.b16 %v512, %v511
    %v527 = vpack.c.b16 %v514, %v513
    %v528 = vpack.c.b16 %v516, %v515
    %v529 = vpack.c.b16 %v518, %v517
    %v530 = vpack.c.b16 %v520, %v519
    %v531 = vpack.c.b16 %v522, %v521
    %v532 = vpack.c.b16 %v524, %v523
    %541 = vmatprep.subr.bf16.mxu0 0
    %542 = vmatpush1.bf16.msra.mxu0 %v525
    %543 = vmatprep.subr.bf16.mxu0 0
    %544 = vmatpush1.bf16.msra.mxu0 %v526
    %545 = vmatprep.subr.bf16.mxu0 0
    %546 = vmatpush1.bf16.msra.mxu0 %v527
    %547 = vmatprep.subr.bf16.mxu0 0
    %548 = vmatpush1.bf16.msra.mxu0 %v528
    %549 = vmatprep.subr.bf16.mxu0 0
    %550 = vmatpush1.bf16.msra.mxu0 %v529
    %551 = vmatprep.subr.bf16.mxu0 0
    %552 = vmatpush1.bf16.msra.mxu0 %v530
    %553 = vmatprep.subr.bf16.mxu0 0
    %554 = vmatpush1.bf16.msra.mxu0 %v531
    %555 = vmatprep.subr.bf16.mxu0 0
    %556 = vmatpush1.bf16.msra.mxu0 %v532
    %557 = vmatprep.subr.bf16.mxu0 0
    %558 = vmatpush1.bf16.msra.mxu0 0
    %559 = vmatprep.subr.bf16.mxu0 0
    %560 = vmatpush1.bf16.msra.mxu0 0
    %561 = vmatprep.subr.bf16.mxu0 0
    %562 = vmatpush1.bf16.msra.mxu0 0
    %563 = vmatprep.subr.bf16.mxu0 0
    %564 = vmatpush1.bf16.msra.mxu0 0
    %565 = vmatprep.subr.bf16.mxu0 0
    %566 = vmatpush1.bf16.msra.mxu0 0
    %567 = vmatprep.subr.bf16.mxu0 0
    %568 = vmatpush1.bf16.msra.mxu0 0
    %569 = vmatprep.subr.bf16.mxu0 0
    %570 = vmatpush1.bf16.msra.mxu0 0
    %571 = vmatprep.subr.bf16.mxu0 0
    %572 = vmatpush1.bf16.msra.mxu0 0
    %573 = vmatprep.mubr.bf16.mxu0 0
    %574 = vmatmul.mubr.bf16.gmra.mrb[0].mxu0 %v467
    %v575 = vpop.f32.mrb[0].mxu0
    %v576 = vadd.f32 %v491, %v575
    %v577 = vpop.f32.mrb[0].mxu0
    %v578 = vpop.f32.mrb[0].mxu0
    %v579 = vadd.f32 %v491, %v578
    %v580 = vpop.f32.mrb[0].mxu0
    %581 = vdwg.mxu0
    %v582 = vxor.u32 %v576, 2147483648
    %v583 = vxor.u32 %v579, 2147483648
    %v584 = vmul.f32 %v582, 1.442695
    %v585 = vpow.pop %v584
    %v586 = vmul.f32 %v583, 1.442695
    %v587 = vpow.pop %v586
    %v588 = vadd.f32 %v585, 1.0
    %v589 = vadd.f32 %v587, 1.0
    %v590 = vrcp.pop %v588
    %v591 = vmul.f32 1.0, %v590
    %v592 = vrcp.pop %v589
    %v593 = vmul.f32 1.0, %v592
    %s594 = scalar_lea.vmem [#allocation7], 48
    %v595 = vld [vmem:[%s594] sm:$0xff]
    %v596 = vld [vmem:[%s594 + $0x8] sm:$0xff]
    %vm597 = vcmp.gt.f32.partialorder %v591, %v595
    %vm598 = vcmp.gt.f32.partialorder %v593, %v596
    %v599 = vsel %vm597, 1, 0
    %v600 = vsel %vm598, 1, 0
    %v601 = vcvt.s32.f32 %v599
    %v602 = vcvt.s32.f32 %v600
    %v603 = vpack.c.bf16 %v602, %v601
    %v604 = vunpack.c.l.bf16 %v603
    %v605 = vunpack.c.h.bf16 %v603
    %606 = vst [vmem:[#allocation8] sm:$0xff] %v604
    %607 = vst [vmem:[#allocation8 + $0x8] sm:$0xff] %v605
    // Predicated region
    $region30: #{tpu_custom_call.1} parent=1 // pred_check
      _
    $region31: #{tpu_custom_call.1} parent=1 // pred_check_branch
      %609 = sbr.rel (0) target = $region33
    $region32: #{tpu_custom_call.1} parent=1 // pred_region
      %s611 = ssub.s32 256, 256
      %612 = vsyncadd [#allocation4], %s611
      %s613 = sshll.u32 [#allocation8], 4
      %s614 = int_to_ptr.vmem [resolvable:$true] %s613
      %619 = dma.vmem_to_hbm [thread:$0]  %s614, 256, %s4, [#allocation4], 128, 128, 8
    $region33: #{tpu_custom_call.1} parent=1 // pred_fallthru
      _
    // Predicated region
    $region34: #{tpu_custom_call.1} parent=1 // pred_check
      _
    $region35: #{tpu_custom_call.1} parent=1 // pred_check_branch
      %621 = sbr.rel (0) target = $region37
    $region36: #{tpu_custom_call.1} parent=1 // pred_region
      %622 = dma.done [#allocation4], 256
    $region37: #{tpu_custom_call.1} parent=1 // pred_fallthru
      _
    %623 = vsyncpa [#allocation3], 1
    %624 = vsyncpa [#allocation6], 1
    %625 = vsyncpa [#allocation4], 1

</llo_original>
